<compile_context>
chip_gen: v7x
topology: tpu7x:2x2x1
jax: 0.10.0
libtpu: 0.0.40
codegen_flags: <defaults>
</compile_context>

<pallas_src>
import math

import jax
import jax.numpy as jnp
from jax import lax
from jax.experimental import pallas as pl
from jax.experimental.pallas import tpu as pltpu

_INV_SQRT2 = 1.0 / math.sqrt(2.0)
_LN_EPS = 1e-6


def _round_up(n, m):
    return ((n + m - 1) // m) * m


def _mlp_head_kernel(x_ref, w1_ref, b1_ref, g_ref, beta_ref, w2_ref, b2_ref,
                     o_ref):
    # ---- global average pool: 1/(H*W) is folded into w1, so just sum lanes ----
    x = x_ref[...].astype(jnp.float32)                 # (TB, C, HW)
    pooled = jnp.sum(x, axis=-1)                       # (TB, C)

    # ---- fc1: (TB, C) @ (C, Hid) + b1 ----
    h = jnp.dot(pooled, w1_ref[...],
                preferred_element_type=jnp.float32) + b1_ref[...]   # (TB, Hid)

    # ---- exact GELU (matches nn.GELU default, erf formulation) ----
    h = 0.5 * h * (1.0 + lax.erf(h * _INV_SQRT2))

    # ---- LayerNorm over last dim, eps=1e-6, affine ----
    mu = jnp.mean(h, axis=-1, keepdims=True)
    var = jnp.mean((h - mu) * (h - mu), axis=-1, keepdims=True)
    h = (h - mu) * lax.rsqrt(var + _LN_EPS)
    h = h * g_ref[...] + beta_ref[...]

    # Dropout(p=0.0) is the identity at inference -> no-op.

    # ---- fc2: (TB, Hid) @ (Hid, NC_pad) + b2 ----
    out = jnp.dot(h, w2_ref[...],
                  preferred_element_type=jnp.float32) + b2_ref[...]
    o_ref[...] = out.astype(o_ref.dtype)


def mlp_head(x, w1, b1, gamma, beta, w2, b2):
    """x: (B, C, H, W) f32.  w1: (C, Hid), w2: (Hid, NC) (already transposed
    from PyTorch (out, in) layout).  b1/gamma/beta: (1, Hid), b2: (1, NC).
    Returns (B, NC) f32."""
    B, C, H, W = x.shape
    HW = H * W
    hidden = w1.shape[1]
    num_classes = w2.shape[1]

    # --- wrapper-side layout prep ----------------------------------------
    # Spatial goes to the lane axis; fold the mean scale into w1.
    x3 = x.reshape(B, C, HW)
    w1_s = (w1 * (1.0 / float(HW))).astype(jnp.float32)

    # Lane-dense output: pad num_classes to a multiple of 128 with zero cols.
    nc_pad = _round_up(num_classes, 128)
    if nc_pad != num_classes:
        w2 = jnp.pad(w2, ((0, 0), (0, nc_pad - num_classes)))
        b2 = jnp.pad(b2, ((0, 0), (0, nc_pad - num_classes)))

    # Batch tile: multiple of 8, capped at 256 (fills MXU M) and capped so the
    # double-buffered x block stays well under the v7x VMEM budget.
    TB = min(256, _round_up(B, 8))
    x_block_bytes = TB * C * HW * 4
    while TB > 8 and 2 * x_block_bytes > (24 << 20):
        TB -= 8
        x_block_bytes = TB * C * HW * 4

    B_pad = _round_up(B, TB)
    if B_pad != B:
        x3 = jnp.pad(x3, ((0, B_pad - B), (0, 0), (0, 0)))

    grid = (B_pad // TB,)

    # --- VMEM budget: 2x-buffered x + out blocks, 2x params, headroom -----
    out_block_bytes = TB * nc_pad * 4
    param_bytes = 4 * (w1_s.size + b1.size + gamma.size + beta.size
                       + w2.size + b2.size)
    vmem_limit = 2 * (x_block_bytes + out_block_bytes) + 2 * param_bytes
    vmem_limit = int(min(max(vmem_limit + (4 << 20), 8 << 20), 64 << 20))

    const2 = lambda i: (0, 0)
    out_pad = pl.pallas_call(
        _mlp_head_kernel,
        out_shape=jax.ShapeDtypeStruct((B_pad, nc_pad), jnp.float32),
        grid=grid,
        in_specs=[
            pl.BlockSpec((TB, C, HW), lambda i: (i, 0, 0)),   # x tile (pipelined)
            pl.BlockSpec((C, hidden), const2),                # w1 (resident)
            pl.BlockSpec((1, hidden), const2),                # b1
            pl.BlockSpec((1, hidden), const2),                # gamma
            pl.BlockSpec((1, hidden), const2),                # beta
            pl.BlockSpec((hidden, nc_pad), const2),           # w2
            pl.BlockSpec((1, nc_pad), const2),                # b2
        ],
        out_specs=pl.BlockSpec((TB, nc_pad), lambda i: (i, 0)),
        compiler_params=pltpu.CompilerParams(
            dimension_semantics=("parallel",),
            vmem_limit_bytes=vmem_limit,
        ),
    )(x3, w1_s, b1, gamma, beta, w2, b2)

    return out_pad[:B, :num_classes]


def _reference(x, w1, b1, gamma, beta, w2, b2):
    pooled = jnp.mean(x, axis=(2, 3))
    h = pooled @ w1 + b1
    h = 0.5 * h * (1.0 + lax.erf(h * _INV_SQRT2))
    mu = jnp.mean(h, axis=-1, keepdims=True)
    var = jnp.mean((h - mu) ** 2, axis=-1, keepdims=True)
    h = (h - mu) / jnp.sqrt(var + _LN_EPS) * gamma + beta
    return h @ w2 + b2


if __name__ == "__main__":
    # Small shapes consistent with the module: dim=16, mlp_ratio=3 -> hidden=48.
    B, C, H, W = 2, 16, 8, 8
    mlp_ratio = 3
    hidden = int(mlp_ratio * C)     # 48
    num_classes = 32

    key = jax.random.PRNGKey(0)
    kx, k1, kb1, k2, kb2 = jax.random.split(key, 5)

    x = jax.random.normal(kx, (B, C, H, W), dtype=jnp.float32)

    # PyTorch stores Linear weight as (out, in); generate directly in (in, out).
    w1 = jax.random.normal(k1, (C, hidden), dtype=jnp.float32) * 0.1
    b1 = jax.random.normal(kb1, (1, hidden), dtype=jnp.float32) * 0.01
    gamma = jnp.ones((1, hidden), dtype=jnp.float32)    # LayerNorm weight init
    beta = jnp.zeros((1, hidden), dtype=jnp.float32)    # LayerNorm bias init
    w2 = jax.random.normal(k2, (hidden, num_classes), dtype=jnp.float32) * 0.1
    b2 = jax.random.normal(kb2, (1, num_classes), dtype=jnp.float32) * 0.01

    out = mlp_head(x, w1, b1, gamma, beta, w2, b2)
    out = jax.block_until_ready(out)

    ref = _reference(x, w1, b1, gamma, beta, w2, b2)
    assert out.shape == (B, num_classes)
    assert jnp.allclose(out, ref, atol=1e-4, rtol=1e-4), "mismatch vs reference"

    print("KERNEL_OK")
</pallas_src>

<mosaic_0001>
module attributes {stable_mosaic.version = 11 : i64} {
  func.func @_mlp_head_kernel(%arg0: i32, %arg1: memref<8x16x64xf32, #tpu.memory_space<vmem>>, %arg2: memref<16x48xf32, #tpu.memory_space<vmem>>, %arg3: memref<1x48xf32, #tpu.memory_space<vmem>>, %arg4: memref<1x48xf32, #tpu.memory_space<vmem>>, %arg5: memref<1x48xf32, #tpu.memory_space<vmem>>, %arg6: memref<48x128xf32, #tpu.memory_space<vmem>>, %arg7: memref<1x128xf32, #tpu.memory_space<vmem>>, %arg8: memref<8x128xf32, #tpu.memory_space<vmem>>) attributes {dimension_semantics = [#tpu.dimension_semantics<parallel>], iteration_bounds = array<i64: 1>, scalar_prefetch = 0 : i64, scratch_operands = 0 : i64, tpu.core_type = #tpu.core_type<tc>, window_params = [{transform_indices = @transform_0, window_bounds = array<i64: 8, 16, 64>}, {pipeline_mode = #tpu.pipeline_mode<synchronous>, transform_indices = @transform_1, window_bounds = array<i64: 16, 48>}, {pipeline_mode = #tpu.pipeline_mode<synchronous>, transform_indices = @transform_2, window_bounds = array<i64: 1, 48>}, {pipeline_mode = #tpu.pipeline_mode<synchronous>, transform_indices = @transform_3, window_bounds = array<i64: 1, 48>}, {pipeline_mode = #tpu.pipeline_mode<synchronous>, transform_indices = @transform_4, window_bounds = array<i64: 1, 48>}, {pipeline_mode = #tpu.pipeline_mode<synchronous>, transform_indices = @transform_5, window_bounds = array<i64: 48, 128>}, {pipeline_mode = #tpu.pipeline_mode<synchronous>, transform_indices = @transform_6, window_bounds = array<i64: 1, 128>}, {transform_indices = @transform_7, window_bounds = array<i64: 8, 128>}]} {
    %c0 = arith.constant 0 : index
    %c0_0 = arith.constant 0 : index
    %c0_1 = arith.constant 0 : index
    %0 = vector.load %arg1[%c0, %c0_0, %c0_1] : memref<8x16x64xf32, #tpu.memory_space<vmem>>, vector<8x16x64xf32>
    %cst = arith.constant dense<0.000000e+00> : vector<8x16xf32>
    %1 = vector.multi_reduction <add>, %0, %cst [2] : vector<8x16x64xf32> to vector<8x16xf32>
    %c0_2 = arith.constant 0 : index
    %c0_3 = arith.constant 0 : index
    %2 = vector.load %arg2[%c0_2, %c0_3] : memref<16x48xf32, #tpu.memory_space<vmem>>, vector<16x48xf32>
    %cst_4 = arith.constant dense<0.000000e+00> : vector<8x48xf32>
    %3 = tpu.matmul %1, %2, %cst_4 {dimension_numbers = #tpu.dot_dimension_numbers<[1], [0], [0], [1], [0, 0, 1, 1], [], []>} : vector<8x16xf32>, vector<16x48xf32>, vector<8x48xf32> -> vector<8x48xf32>
    %c0_5 = arith.constant 0 : index
    %c0_6 = arith.constant 0 : index
    %4 = vector.load %arg3[%c0_5, %c0_6] : memref<1x48xf32, #tpu.memory_space<vmem>>, vector<1x48xf32>
    %5 = vector.broadcast %4 : vector<1x48xf32> to vector<8x48xf32>
    %6 = arith.addf %3, %5 : vector<8x48xf32>
    %cst_7 = arith.constant 5.000000e-01 : f32
    %7 = vector.broadcast %cst_7 : f32 to vector<8x48xf32>
    %8 = arith.mulf %7, %6 : vector<8x48xf32>
    %cst_8 = arith.constant 0.707106769 : f32
    %9 = vector.broadcast %cst_8 : f32 to vector<8x48xf32>
    %10 = arith.mulf %6, %9 : vector<8x48xf32>
    %11 = math.erf %10 : vector<8x48xf32>
    %cst_9 = arith.constant 1.000000e+00 : f32
    %12 = vector.broadcast %cst_9 : f32 to vector<8x48xf32>
    %13 = arith.addf %12, %11 : vector<8x48xf32>
    %14 = arith.mulf %8, %13 : vector<8x48xf32>
    %cst_10 = arith.constant dense<0.000000e+00> : vector<8xf32>
    %15 = vector.multi_reduction <add>, %14, %cst_10 [1] : vector<8x48xf32> to vector<8xf32>
    %16 = vector.shape_cast %15 : vector<8xf32> to vector<8x1xf32>
    %cst_11 = arith.constant 4.800000e+01 : f32
    %17 = vector.broadcast %cst_11 : f32 to vector<8x1xf32>
    %18 = arith.divf %16, %17 : vector<8x1xf32>
    %19 = vector.broadcast %18 : vector<8x1xf32> to vector<8x48xf32>
    %20 = arith.subf %14, %19 : vector<8x48xf32>
    %21 = vector.broadcast %18 : vector<8x1xf32> to vector<8x48xf32>
    %22 = arith.subf %14, %21 : vector<8x48xf32>
    %23 = arith.mulf %20, %22 : vector<8x48xf32>
    %cst_12 = arith.constant dense<0.000000e+00> : vector<8xf32>
    %24 = vector.multi_reduction <add>, %23, %cst_12 [1] : vector<8x48xf32> to vector<8xf32>
    %25 = vector.shape_cast %24 : vector<8xf32> to vector<8x1xf32>
    %cst_13 = arith.constant 4.800000e+01 : f32
    %26 = vector.broadcast %cst_13 : f32 to vector<8x1xf32>
    %27 = arith.divf %25, %26 : vector<8x1xf32>
    %28 = vector.broadcast %18 : vector<8x1xf32> to vector<8x48xf32>
    %29 = arith.subf %14, %28 : vector<8x48xf32>
    %cst_14 = arith.constant 9.99999997E-7 : f32
    %30 = vector.broadcast %cst_14 : f32 to vector<8x1xf32>
    %31 = arith.addf %27, %30 : vector<8x1xf32>
    %32 = math.rsqrt %31 : vector<8x1xf32>
    %33 = vector.broadcast %32 : vector<8x1xf32> to vector<8x48xf32>
    %34 = arith.mulf %29, %33 : vector<8x48xf32>
    %c0_15 = arith.constant 0 : index
    %c0_16 = arith.constant 0 : index
    %35 = vector.load %arg4[%c0_15, %c0_16] : memref<1x48xf32, #tpu.memory_space<vmem>>, vector<1x48xf32>
    %36 = vector.broadcast %35 : vector<1x48xf32> to vector<8x48xf32>
    %37 = arith.mulf %34, %36 : vector<8x48xf32>
    %c0_17 = arith.constant 0 : index
    %c0_18 = arith.constant 0 : index
    %38 = vector.load %arg5[%c0_17, %c0_18] : memref<1x48xf32, #tpu.memory_space<vmem>>, vector<1x48xf32>
    %39 = vector.broadcast %38 : vector<1x48xf32> to vector<8x48xf32>
    %40 = arith.addf %37, %39 : vector<8x48xf32>
    %c0_19 = arith.constant 0 : index
    %c0_20 = arith.constant 0 : index
    %41 = vector.load %arg6[%c0_19, %c0_20] : memref<48x128xf32, #tpu.memory_space<vmem>>, vector<48x128xf32>
    %cst_21 = arith.constant dense<0.000000e+00> : vector<8x128xf32>
    %42 = tpu.matmul %40, %41, %cst_21 {dimension_numbers = #tpu.dot_dimension_numbers<[1], [0], [0], [1], [0, 0, 1, 1], [], []>} : vector<8x48xf32>, vector<48x128xf32>, vector<8x128xf32> -> vector<8x128xf32>
    %c0_22 = arith.constant 0 : index
    %c0_23 = arith.constant 0 : index
    %43 = vector.load %arg7[%c0_22, %c0_23] : memref<1x128xf32, #tpu.memory_space<vmem>>, vector<1x128xf32>
    %44 = vector.broadcast %43 : vector<1x128xf32> to vector<8x128xf32>
    %45 = arith.addf %42, %44 : vector<8x128xf32>
    %c0_24 = arith.constant 0 : index
    %c0_25 = arith.constant 0 : index
    %46 = vector.load %arg8[%c0_24, %c0_25] : memref<8x128xf32, #tpu.memory_space<vmem>>, vector<8x128xf32>
    tpu.vector_store %arg8[%c0_24, %c0_25], %45 {strides = array<i32>} : memref<8x128xf32, #tpu.memory_space<vmem>>, vector<8x128xf32>,
    return
  }
  func.func @transform_0(%arg0: i32) -> (i32, i32, i32) {
    %c0_i32 = arith.constant 0 : i32
    %c0_i32_0 = arith.constant 0 : i32
    %c0_i32_1 = arith.constant 0 : i32
    return %arg0, %c0_i32, %c0_i32_0 : i32, i32, i32
  }
  func.func @transform_1(%arg0: i32) -> (i32, i32) {
    %c0_i32 = arith.constant 0 : i32
    %c0_i32_0 = arith.constant 0 : i32
    %c0_i32_1 = arith.constant 0 : i32
    return %c0_i32, %c0_i32_0 : i32, i32
  }
  func.func @transform_2(%arg0: i32) -> (i32, i32) {
    %c0_i32 = arith.constant 0 : i32
    %c0_i32_0 = arith.constant 0 : i32
    %c0_i32_1 = arith.constant 0 : i32
    return %c0_i32, %c0_i32_0 : i32, i32
  }
  func.func @transform_3(%arg0: i32) -> (i32, i32) {
    %c0_i32 = arith.constant 0 : i32
    %c0_i32_0 = arith.constant 0 : i32
    %c0_i32_1 = arith.constant 0 : i32
    return %c0_i32, %c0_i32_0 : i32, i32
  }
  func.func @transform_4(%arg0: i32) -> (i32, i32) {
    %c0_i32 = arith.constant 0 : i32
    %c0_i32_0 = arith.constant 0 : i32
    %c0_i32_1 = arith.constant 0 : i32
    return %c0_i32, %c0_i32_0 : i32, i32
  }
  func.func @transform_5(%arg0: i32) -> (i32, i32) {
    %c0_i32 = arith.constant 0 : i32
    %c0_i32_0 = arith.constant 0 : i32
    %c0_i32_1 = arith.constant 0 : i32
    return %c0_i32, %c0_i32_0 : i32, i32
  }
  func.func @transform_6(%arg0: i32) -> (i32, i32) {
    %c0_i32 = arith.constant 0 : i32
    %c0_i32_0 = arith.constant 0 : i32
    %c0_i32_1 = arith.constant 0 : i32
    return %c0_i32, %c0_i32_0 : i32, i32
  }
  func.func @transform_7(%arg0: i32) -> (i32, i32) {
    %c0_i32 = arith.constant 0 : i32
    %c0_i32_0 = arith.constant 0 : i32
    return %arg0, %c0_i32 : i32, i32
  }
}

</mosaic_0001>

<llo_original>
// kernel: tpu_custom_call.1
$region0: #{tpu_custom_call.1}
  #allocation0 [shape = 'u32[]', space=smem, size = 0x4, offset = 0x4, fixed_abs, tag = 'smem constant byte address 0x4 - core index']
  #allocation1 [shape = 'u32[144,128]{1,0:T(1,128)}', space=vmem, size = 0x12000, scoped, tag = 'internal scratch']
  %s0 = inlined_call_operand.hbm [shape: f32[8,16,64], index: 0, kind: input, shape index: {}]
  %s1 = inlined_call_operand.hbm [shape: f32[16,48], index: 1, kind: input, shape index: {}]
  %s2 = inlined_call_operand.vmem [shape: f32[1,48], index: 2, kind: input, shape index: {}]
  %s3 = inlined_call_operand.vmem [shape: f32[1,48], index: 3, kind: input, shape index: {}]
  %s4 = inlined_call_operand.vmem [shape: f32[1,48], index: 4, kind: input, shape index: {}]
  %s5 = inlined_call_operand.hbm [shape: f32[48,128], index: 5, kind: input, shape index: {}]
  %s6 = inlined_call_operand.vmem [shape: f32[1,128], index: 6, kind: input, shape index: {}]
  %s7 = inlined_call_operand.hbm [shape: f32[8,128], index: 7, kind: output, shape index: {}]
  %s8 = sld [smem:[#allocation0]]
  $region50: #{tpu_custom_call.1} parent=0
    _
  %s10 = ssub.s32 1, %s8
  %s11 = scalar_select 0, %s10, %s8
  $region1: #{tpu_custom_call.1} parent=0
    #allocation2 [shape = 'u8[65536]{0}', space=vmem, size = 0x10000, scoped, tag = 'input window, operand 0, single buffered']
    #allocation3 [shape = 's32[1]{0}', space=sflag, size = 0x4, scoped, tag = 'scoped memory for tpu_custom_call.1']
    #allocation4 [shape = 's32[1]{0}', space=sflag, size = 0x4, scoped, tag = 'scoped memory for tpu_custom_call.1']
    #allocation5 [shape = 'u8[8192]{0}', space=vmem, size = 0x2000, scoped, tag = 'input window, operand 1, single buffered']
    #allocation6 [shape = 's32[1]{0}', space=sflag, size = 0x4, scoped, tag = 'scoped memory for tpu_custom_call.1']
    #allocation7 [shape = 'u8[24576]{0}', space=vmem, size = 0x6000, scoped, tag = 'input window, operand 5, single buffered']
    #allocation8 [shape = 'u8[4096]{0}', space=vmem, size = 0x1000, scoped, tag = 'output window, operand 0, single buffered']
    %12 = vsyncpa [#allocation3], 0
    %13 = vsyncpa [#allocation6], 0
    %14 = vsyncpa [#allocation4], 0
    // Predicated region
    $region2: #{tpu_custom_call.1} parent=1 // pred_check
      _
    $region3: #{tpu_custom_call.1} parent=1 // pred_check_branch
      %16 = sbr.rel (0) target = $region5
    $region4: #{tpu_custom_call.1} parent=1 // pred_region
      %s18 = ssub.s32 2048, 2048
      %19 = vsyncadd [#allocation3], %s18
      %s20 = sshll.u32 [#allocation2], 4
      %s21 = int_to_ptr.vmem [resolvable:$true] %s20
      %26 = dma.hbm_to_vmem [thread:$0]  %s0, 2048, %s21, [#allocation3], 128, 128, 8
    $region5: #{tpu_custom_call.1} parent=1 // pred_fallthru
      _
    // Predicated region
    $region6: #{tpu_custom_call.1} parent=1 // pred_check
      _
    $region7: #{tpu_custom_call.1} parent=1 // pred_check_branch
      %28 = sbr.rel (0) target = $region9
    $region8: #{tpu_custom_call.1} parent=1 // pred_region
      %s30 = ssub.s32 256, 256
      %31 = vsyncadd [#allocation6], %s30
      %s32 = sshll.u32 [#allocation5], 4
      %s33 = int_to_ptr.vmem [resolvable:$true] %s32
      %38 = dma.hbm_to_vmem [thread:$0]  %s1, 256, %s33, [#allocation6], 128, 128, 8
    $region9: #{tpu_custom_call.1} parent=1 // pred_fallthru
      _
    // Predicated region
    $region10: #{tpu_custom_call.1} parent=1 // pred_check
      _
    $region11: #{tpu_custom_call.1} parent=1 // pred_check_branch
      %40 = sbr.rel (0) target = $region13
    $region12: #{tpu_custom_call.1} parent=1 // pred_region
      _
    $region13: #{tpu_custom_call.1} parent=1 // pred_fallthru
      _
    // Predicated region
    $region14: #{tpu_custom_call.1} parent=1 // pred_check
      _
    $region15: #{tpu_custom_call.1} parent=1 // pred_check_branch
      %42 = sbr.rel (0) target = $region17
    $region16: #{tpu_custom_call.1} parent=1 // pred_region
      _
    $region17: #{tpu_custom_call.1} parent=1 // pred_fallthru
      _
    // Predicated region
    $region18: #{tpu_custom_call.1} parent=1 // pred_check
      _
    $region19: #{tpu_custom_call.1} parent=1 // pred_check_branch
      %44 = sbr.rel (0) target = $region21
    $region20: #{tpu_custom_call.1} parent=1 // pred_region
      _
    $region21: #{tpu_custom_call.1} parent=1 // pred_fallthru
      _
    // Predicated region
    $region22: #{tpu_custom_call.1} parent=1 // pred_check
      _
    $region23: #{tpu_custom_call.1} parent=1 // pred_check_branch
      %46 = sbr.rel (0) target = $region25
    $region24: #{tpu_custom_call.1} parent=1 // pred_region
      %s48 = ssub.s32 768, 768
      %49 = vsyncadd [#allocation6], %s48
      %s50 = sshll.u32 [#allocation7], 4
      %s51 = int_to_ptr.vmem [resolvable:$true] %s50
      %56 = dma.hbm_to_vmem [thread:$0]  %s5, 768, %s51, [#allocation6], 128, 128, 8
    $region25: #{tpu_custom_call.1} parent=1 // pred_fallthru
      _
    // Predicated region
    $region26: #{tpu_custom_call.1} parent=1 // pred_check
      _
    $region27: #{tpu_custom_call.1} parent=1 // pred_check_branch
      %58 = sbr.rel (0) target = $region29
    $region28: #{tpu_custom_call.1} parent=1 // pred_region
      _
    $region29: #{tpu_custom_call.1} parent=1 // pred_fallthru
      _
    // Predicated region
    $region30: #{tpu_custom_call.1} parent=1 // pred_check
      _
    $region31: #{tpu_custom_call.1} parent=1 // pred_check_branch
      %60 = sbr.rel (0) target = $region33
    $region32: #{tpu_custom_call.1} parent=1 // pred_region
      %61 = dma.done [#allocation3], 2048
    $region33: #{tpu_custom_call.1} parent=1 // pred_fallthru
      _
    // Predicated region
    $region34: #{tpu_custom_call.1} parent=1 // pred_check
      _
    $region35: #{tpu_custom_call.1} parent=1 // pred_check_branch
      %63 = sbr.rel (0) target = $region37
    $region36: #{tpu_custom_call.1} parent=1 // pred_region
      %64 = dma.done [#allocation6], 256
    $region37: #{tpu_custom_call.1} parent=1 // pred_fallthru
      _
    // Predicated region
    $region38: #{tpu_custom_call.1} parent=1 // pred_check
      _
    $region39: #{tpu_custom_call.1} parent=1 // pred_check_branch
      %66 = sbr.rel (0) target = $region41
    $region40: #{tpu_custom_call.1} parent=1 // pred_region
      %67 = dma.done [#allocation6], 768
    $region41: #{tpu_custom_call.1} parent=1 // pred_fallthru
      _
    %v68 = vld [vmem:[#allocation2] sm:$0xff]
    %v69 = vld [vmem:[#allocation2 + $0x8] sm:$0xff]
    %v70 = vld [vmem:[#allocation2 + $0x10] sm:$0xff]
    %v71 = vld [vmem:[#allocation2 + $0x18] sm:$0xff]
    %v72 = vld [vmem:[#allocation2 + $0x20] sm:$0xff]
    %v73 = vld [vmem:[#allocation2 + $0x28] sm:$0xff]
    %v74 = vld [vmem:[#allocation2 + $0x30] sm:$0xff]
    %v75 = vld [vmem:[#allocation2 + $0x38] sm:$0xff]
    %v76 = vld [vmem:[#allocation2 + $0x40] sm:$0xff]
    %v77 = vld [vmem:[#allocation2 + $0x48] sm:$0xff]
    %v78 = vld [vmem:[#allocation2 + $0x50] sm:$0xff]
    %v79 = vld [vmem:[#allocation2 + $0x58] sm:$0xff]
    %v80 = vld [vmem:[#allocation2 + $0x60] sm:$0xff]
    %v81 = vld [vmem:[#allocation2 + $0x68] sm:$0xff]
    %v82 = vld [vmem:[#allocation2 + $0x70] sm:$0xff]
    %v83 = vld [vmem:[#allocation2 + $0x78] sm:$0xff]
    %vm84 = vcmask 523264
    %v85 = vsel %vm84, %v68, 0.0
    %86 = vadd.xlane.f32.xlu0 %v85
    %v87 = vpop.xlane.xlu0 %86
    %v88 = vsel %vm84, %v69, 0.0
    %89 = vadd.xlane.f32.xlu0 %v88
    %v90 = vpop.xlane.xlu0 %89
    %v91 = vsel %vm84, %v70, 0.0
    %92 = vadd.xlane.f32.xlu0 %v91
    %v93 = vpop.xlane.xlu0 %92
    %v94 = vsel %vm84, %v71, 0.0
    %95 = vadd.xlane.f32.xlu0 %v94
    %v96 = vpop.xlane.xlu0 %95
    %v97 = vsel %vm84, %v72, 0.0
    %98 = vadd.xlane.f32.xlu0 %v97
    %v99 = vpop.xlane.xlu0 %98
    %v100 = vsel %vm84, %v73, 0.0
    %101 = vadd.xlane.f32.xlu0 %v100
    %v102 = vpop.xlane.xlu0 %101
    %v103 = vsel %vm84, %v74, 0.0
    %104 = vadd.xlane.f32.xlu0 %v103
    %v105 = vpop.xlane.xlu0 %104
    %v106 = vsel %vm84, %v75, 0.0
    %107 = vadd.xlane.f32.xlu0 %v106
    %v108 = vpop.xlane.xlu0 %107
    %v109 = vsel %vm84, %v76, 0.0
    %110 = vadd.xlane.f32.xlu0 %v109
    %v111 = vpop.xlane.xlu0 %110
    %v112 = vsel %vm84, %v77, 0.0
    %113 = vadd.xlane.f32.xlu0 %v112
    %v114 = vpop.xlane.xlu0 %113
    %v115 = vsel %vm84, %v78, 0.0
    %116 = vadd.xlane.f32.xlu0 %v115
    %v117 = vpop.xlane.xlu0 %116
    %v118 = vsel %vm84, %v79, 0.0
    %119 = vadd.xlane.f32.xlu0 %v118
    %v120 = vpop.xlane.xlu0 %119
    %v121 = vsel %vm84, %v80, 0.0
    %122 = vadd.xlane.f32.xlu0 %v121
    %v123 = vpop.xlane.xlu0 %122
    %v124 = vsel %vm84, %v81, 0.0
    %125 = vadd.xlane.f32.xlu0 %v124
    %v126 = vpop.xlane.xlu0 %125
    %v127 = vsel %vm84, %v82, 0.0
    %128 = vadd.xlane.f32.xlu0 %v127
    %v129 = vpop.xlane.xlu0 %128
    %v130 = vsel %vm84, %v83, 0.0
    %131 = vadd.xlane.f32.xlu0 %v130
    %v132 = vpop.xlane.xlu0 %131
    %v133 = vld [vmem:[#allocation5] sm:$0xff]
    %v134 = vld [vmem:[#allocation5 + $0x8] sm:$0xff]
    %v135 = vld [vmem:[%s2] sm:$0x1]
    %v137 = vlaneseq
    %v138 = vshrl.u32 %v137, 7
    %v139 = vsub.s32 0, %v138
    %v140 = vrot.slane %v135, %v139
    %v158 = vlaneseq
    %v159 = vand.u32 %v158, 127
    %v160 = vlaneseq
    %v161 = vshrl.u32 %v160, 7
    %v162 = vsub.s32 %v159, %v161
    %v163 = vrot.slane %v87, %v162
    %v164 = vadd.s32 %v159, 4294967288
    %v165 = vlaneseq
    %v166 = vshrl.u32 %v165, 7
    %v167 = vsub.s32 %v164, %v166
    %v168 = vrot.slane %v90, %v167
    %vm169 = vcmask 130112
    %v170 = vsel %vm169, %v168, %v163
    %v171 = vlaneseq
    %v172 = vshrl.u32 %v171, 7
    %v173 = vsub.s32 %v159, %v172
    %v174 = vrot.slane %v93, %v173
    %v175 = vlaneseq
    %v176 = vshrl.u32 %v175, 7
    %v177 = vsub.s32 %v164, %v176
    %v178 = vrot.slane %v96, %v177
    %v179 = vsel %vm169, %v178, %v174
    %v180 = vlaneseq
    %v181 = vshrl.u32 %v180, 7
    %v182 = vsub.s32 %v159, %v181
    %v183 = vrot.slane %v99, %v182
    %v184 = vlaneseq
    %v185 = vshrl.u32 %v184, 7
    %v186 = vsub.s32 %v164, %v185
    %v187 = vrot.slane %v102, %v186
    %v188 = vsel %vm169, %v187, %v183
    %v189 = vlaneseq
    %v190 = vshrl.u32 %v189, 7
    %v191 = vsub.s32 %v159, %v190
    %v192 = vrot.slane %v105, %v191
    %v193 = vlaneseq
    %v194 = vshrl.u32 %v193, 7
    %v195 = vsub.s32 %v164, %v194
    %v196 = vrot.slane %v108, %v195
    %v197 = vsel %vm169, %v196, %v192
    %v198 = vlaneseq
    %v199 = vshrl.u32 %v198, 7
    %v200 = vsub.s32 %v159, %v199
    %v201 = vrot.slane %v111, %v200
    %v202 = vlaneseq
    %v203 = vshrl.u32 %v202, 7
    %v204 = vsub.s32 %v164, %v203
    %v205 = vrot.slane %v114, %v204
    %v206 = vsel %vm169, %v205, %v201
    %v207 = vlaneseq
    %v208 = vshrl.u32 %v207, 7
    %v209 = vsub.s32 %v159, %v208
    %v210 = vrot.slane %v117, %v209
    %v211 = vlaneseq
    %v212 = vshrl.u32 %v211, 7
    %v213 = vsub.s32 %v164, %v212
    %v214 = vrot.slane %v120, %v213
    %v215 = vsel %vm169, %v214, %v210
    %v216 = vlaneseq
    %v217 = vshrl.u32 %v216, 7
    %v218 = vsub.s32 %v159, %v217
    %v219 = vrot.slane %v123, %v218
    %v220 = vlaneseq
    %v221 = vshrl.u32 %v220, 7
    %v222 = vsub.s32 %v164, %v221
    %v223 = vrot.slane %v126, %v222
    %v224 = vsel %vm169, %v223, %v219
    %v225 = vlaneseq
    %v226 = vshrl.u32 %v225, 7
    %v227 = vsub.s32 %v159, %v226
    %v228 = vrot.slane %v129, %v227
    %v229 = vlaneseq
    %v230 = vshrl.u32 %v229, 7
    %v231 = vsub.s32 %v164, %v230
    %v232 = vrot.slane %v132, %v231
    %v233 = vsel %vm169, %v232, %v228
    %vm234 = vcmask 1041409
    %v235 = vsel %vm234, %v179, %v170
    %vm236 = vcmask 1042434
    %v237 = vsel %vm236, %v188, %v235
    %vm238 = vcmask 1043459
    %v239 = vsel %vm238, %v197, %v237
    %vm240 = vcmask 1044484
    %v241 = vsel %vm240, %v206, %v239
    %vm242 = vcmask 1045509
    %v243 = vsel %vm242, %v215, %v241
    %vm244 = vcmask 1046534
    %v245 = vsel %vm244, %v224, %v243
    %vm246 = vcmask 1047559
    %v247 = vsel %vm246, %v233, %v245
    %vm248 = vcmask 130048
    %v249 = vsel %vm248, %v247, 0
    %251 = vmatprep.subr.mxu0 0.0
    %252 = vmatpush1.msra.mxu0 %v133
    %253 = vmatprep.subr.mxu0 0.0
    %254 = vmatpush1.msra.mxu0 %v134
    %255 = vmatprep.subr.mxu0 0.0
    %256 = vmatpush1.msra.mxu0 0.0
    %257 = vmatprep.subr.mxu0 0.0
    %258 = vmatpush1.msra.mxu0 0.0
    %259 = vmatprep.subr.mxu0 0.0
    %260 = vmatpush1.msra.mxu0 0.0
    %261 = vmatprep.subr.mxu0 0.0
    %262 = vmatpush1.msra.mxu0 0.0
    %263 = vmatprep.subr.mxu0 0.0
    %264 = vmatpush1.msra.mxu0 0.0
    %265 = vmatprep.subr.mxu0 0.0
    %266 = vmatpush1.msra.mxu0 0.0
    %267 = vmatprep.subr.mxu0 0.0
    %268 = vmatpush1.msra.mxu0 0.0
    %269 = vmatprep.subr.mxu0 0.0
    %270 = vmatpush1.msra.mxu0 0.0
    %271 = vmatprep.subr.mxu0 0.0
    %272 = vmatpush1.msra.mxu0 0.0
    %273 = vmatprep.subr.mxu0 0.0
    %274 = vmatpush1.msra.mxu0 0.0
    %275 = vmatprep.subr.mxu0 0.0
    %276 = vmatpush1.msra.mxu0 0.0
    %277 = vmatprep.subr.mxu0 0.0
    %278 = vmatpush1.msra.mxu0 0.0
    %279 = vmatprep.subr.mxu0 0.0
    %280 = vmatpush1.msra.mxu0 0.0
    %281 = vmatprep.subr.mxu0 0.0
    %282 = vmatpush1.msra.mxu0 0.0
    %283 = vmatprep.subr.mxu0 0.0
    %284 = vmatpush1.msra.mxu0 0.0
    %285 = vmatprep.subr.mxu0 0.0
    %286 = vmatpush1.msra.mxu0 0.0
    %287 = vmatprep.subr.mxu0 0.0
    %288 = vmatpush1.msra.mxu0 0.0
    %289 = vmatprep.subr.mxu0 0.0
    %290 = vmatpush1.msra.mxu0 0.0
    %291 = vmatprep.subr.mxu0 0.0
    %292 = vmatpush1.msra.mxu0 0.0
    %293 = vmatprep.subr.mxu0 0.0
    %294 = vmatpush1.msra.mxu0 0.0
    %295 = vmatprep.subr.mxu0 0.0
    %296 = vmatpush1.msra.mxu0 0.0
    %297 = vmatprep.subr.mxu0 0.0
    %298 = vmatpush1.msra.mxu0 0.0
    %299 = vmatprep.subr.mxu0 0.0
    %300 = vmatpush1.msra.mxu0 0.0
    %301 = vmatprep.subr.mxu0 0.0
    %302 = vmatpush1.msra.mxu0 0.0
    %303 = vmatprep.subr.mxu0 0.0
    %304 = vmatpush1.msra.mxu0 0.0
    %305 = vmatprep.subr.mxu0 0.0
    %306 = vmatpush1.msra.mxu0 0.0
    %307 = vmatprep.subr.mxu0 0.0
    %308 = vmatpush1.msra.mxu0 0.0
    %309 = vmatprep.subr.mxu0 0.0
    %310 = vmatpush1.msra.mxu0 0.0
    %311 = vmatprep.subr.mxu0 0.0
    %312 = vmatpush1.msra.mxu0 0.0
    %313 = vmatprep.subr.mxu0 0.0
    %314 = vmatpush1.msra.mxu0 0.0
    %315 = vmatprep.mubr.f32.mxu0 0.0
    %316 = vmatmul.mubr.f32.gmra.mrb[0].mxu0 %v249
    %v317 = vpop.f32.mrb[0].mxu0
    %v318 = vadd.f32 %v140, %v317
    %v319 = vpop.f32.mrb[0].mxu0
    %320 = vdwg.mxu0
    %v321 = vmul.f32 %v318, 0.5
    %v322 = vmul.f32 %v318, 0.70710677
    %v323 = verf.f32.pop %v322
    %v324 = vadd.f32 %v323, 1.0
    %v325 = vmul.f32 %v321, %v324
    %vm326 = vcmask 392192
    %v327 = vsel %vm326, %v325, 0.0
    %328 = vadd.xlane.f32.xlu0 %v327
    %v329 = vpop.xlane.xlu0 %328
    %v330 = vrcp.pop 48.0
    %v331 = vmul.f32 %v329, %v330
    %v332 = vsub.f32 %v325, %v331
    %v333 = vmul.f32 %v332, %v332
    %v334 = vsel %vm326, %v333, 0.0
    %335 = vadd.xlane.f32.xlu0 %v334
    %v336 = vpop.xlane.xlu0 %335
    %v337 = vmul.f32 %v336, %v330
    %v338 = vadd.f32 %v337, 1e-06
    %v339 = vrsqrt.pop %v338
    %v340 = vmul.f32 %v332, %v339
    %v341 = vld [vmem:[%s3] sm:$0x1]
    %v343 = vlaneseq
    %v344 = vshrl.u32 %v343, 7
    %v345 = vsub.s32 0, %v344
    %v346 = vrot.slane %v341, %v345
    %v348 = vmul.f32 %v340, %v346
    %v349 = vld [vmem:[%s4] sm:$0x1]
    %v351 = vlaneseq
    %v352 = vshrl.u32 %v351, 7
    %v353 = vsub.s32 0, %v352
    %v354 = vrot.slane %v349, %v353
    %v356 = vadd.f32 %v348, %v354
    %v357 = vld [vmem:[#allocation7] sm:$0xff]
    %v358 = vld [vmem:[#allocation7 + $0x8] sm:$0xff]
    %v359 = vld [vmem:[#allocation7 + $0x10] sm:$0xff]
    %v360 = vld [vmem:[#allocation7 + $0x18] sm:$0xff]
    %v361 = vld [vmem:[#allocation7 + $0x20] sm:$0xff]
    %v362 = vld [vmem:[#allocation7 + $0x28] sm:$0xff]
    %v363 = vld [vmem:[%s6] sm:$0x1]
    %v365 = vlaneseq
    %v366 = vshrl.u32 %v365, 7
    %v367 = vsub.s32 0, %v366
    %v368 = vrot.slane %v363, %v367
    %v371 = vsel %vm326, %v356, 0
    %373 = vmatprep.subr.mxu0 0.0
    %374 = vmatpush1.msra.mxu0 %v357
    %375 = vmatprep.subr.mxu0 0.0
    %376 = vmatpush1.msra.mxu0 %v358
    %377 = vmatprep.subr.mxu0 0.0
    %378 = vmatpush1.msra.mxu0 %v359
    %379 = vmatprep.subr.mxu0 0.0
    %380 = vmatpush1.msra.mxu0 %v360
    %381 = vmatprep.subr.mxu0 0.0
    %382 = vmatpush1.msra.mxu0 %v361
    %383 = vmatprep.subr.mxu0 0.0
    %384 = vmatpush1.msra.mxu0 %v362
    %385 = vmatprep.subr.mxu0 0.0
    %386 = vmatpush1.msra.mxu0 0.0
    %387 = vmatprep.subr.mxu0 0.0
    %388 = vmatpush1.msra.mxu0 0.0
    %389 = vmatprep.subr.mxu0 0.0
    %390 = vmatpush1.msra.mxu0 0.0
    %391 = vmatprep.subr.mxu0 0.0
    %392 = vmatpush1.msra.mxu0 0.0
    %393 = vmatprep.subr.mxu0 0.0
    %394 = vmatpush1.msra.mxu0 0.0
    %395 = vmatprep.subr.mxu0 0.0
    %396 = vmatpush1.msra.mxu0 0.0
    %397 = vmatprep.subr.mxu0 0.0
    %398 = vmatpush1.msra.mxu0 0.0
    %399 = vmatprep.subr.mxu0 0.0
    %400 = vmatpush1.msra.mxu0 0.0
    %401 = vmatprep.subr.mxu0 0.0
    %402 = vmatpush1.msra.mxu0 0.0
    %403 = vmatprep.subr.mxu0 0.0
    %404 = vmatpush1.msra.mxu0 0.0
    %405 = vmatprep.subr.mxu0 0.0
    %406 = vmatpush1.msra.mxu0 0.0
    %407 = vmatprep.subr.mxu0 0.0
    %408 = vmatpush1.msra.mxu0 0.0
    %409 = vmatprep.subr.mxu0 0.0
    %410 = vmatpush1.msra.mxu0 0.0
    %411 = vmatprep.subr.mxu0 0.0
    %412 = vmatpush1.msra.mxu0 0.0
    %413 = vmatprep.subr.mxu0 0.0
    %414 = vmatpush1.msra.mxu0 0.0
    %415 = vmatprep.subr.mxu0 0.0
    %416 = vmatpush1.msra.mxu0 0.0
    %417 = vmatprep.subr.mxu0 0.0
    %418 = vmatpush1.msra.mxu0 0.0
    %419 = vmatprep.subr.mxu0 0.0
    %420 = vmatpush1.msra.mxu0 0.0
    %421 = vmatprep.subr.mxu0 0.0
    %422 = vmatpush1.msra.mxu0 0.0
    %423 = vmatprep.subr.mxu0 0.0
    %424 = vmatpush1.msra.mxu0 0.0
    %425 = vmatprep.subr.mxu0 0.0
    %426 = vmatpush1.msra.mxu0 0.0
    %427 = vmatprep.subr.mxu0 0.0
    %428 = vmatpush1.msra.mxu0 0.0
    %429 = vmatprep.subr.mxu0 0.0
    %430 = vmatpush1.msra.mxu0 0.0
    %431 = vmatprep.subr.mxu0 0.0
    %432 = vmatpush1.msra.mxu0 0.0
    %433 = vmatprep.subr.mxu0 0.0
    %434 = vmatpush1.msra.mxu0 0.0
    %435 = vmatprep.subr.mxu0 0.0
    %436 = vmatpush1.msra.mxu0 0.0
    %437 = vmatprep.mubr.f32.mxu0 0.0
    %438 = vmatmul.mubr.f32.gmra.mrb[0].mxu0 %v371
    %v439 = vpop.f32.mrb[0].mxu0
    %v440 = vadd.f32 %v368, %v439
    %v441 = vpop.f32.mrb[0].mxu0
    %442 = vdwg.mxu0
    %443 = vst [vmem:[#allocation8] sm:$0xff] %v440
    // Predicated region
    $region42: #{tpu_custom_call.1} parent=1 // pred_check
      _
    $region43: #{tpu_custom_call.1} parent=1 // pred_check_branch
      %445 = sbr.rel (0) target = $region45
    $region44: #{tpu_custom_call.1} parent=1 // pred_region
      %s447 = ssub.s32 128, 128
      %448 = vsyncadd [#allocation4], %s447
      %s450 = sshll.u32 [#allocation8], 4
      %s451 = int_to_ptr.vmem [resolvable:$true] %s450
      %453 = dma.vmem_to_hbm [thread:$0]  %s451, 128, %s7, [#allocation4]
    $region45: #{tpu_custom_call.1} parent=1 // pred_fallthru
      _
    // Predicated region
    $region46: #{tpu_custom_call.1} parent=1 // pred_check
      _
    $region47: #{tpu_custom_call.1} parent=1 // pred_check_branch
      %455 = sbr.rel (0) target = $region49
    $region48: #{tpu_custom_call.1} parent=1 // pred_region
      %456 = dma.done [#allocation4], 128
    $region49: #{tpu_custom_call.1} parent=1 // pred_fallthru
      _
    %457 = vsyncpa [#allocation3], 1
    %458 = vsyncpa [#allocation6], 1
    %459 = vsyncpa [#allocation4], 1

</llo_original>
